<compile_context>
chip_gen: v7x
topology: tpu7x:2x2x1
jax: 0.10.0
libtpu: 0.0.40
codegen_flags: <defaults>
</compile_context>

<pallas_src>
import functools

import jax
import jax.numpy as jnp
from jax.experimental import pallas as pl
from jax.experimental.pallas import tpu as pltpu


def _round_up(n, m):
    return (n + m - 1) // m * m


def _cdiv(a, b):
    return (a + b - 1) // b


def _choose_batch_tile(batch, block_b):
    """Pick a lane-aligned batch tile; prefer >= 2 grid steps (v7x megacore)."""
    block_b = _round_up(max(int(block_b), 128), 128)       # lane quantum
    b_min = _round_up(batch, 128)
    tb = min(block_b, b_min)
    # v7x has 2 TensorCores: a 1-step grid leaves one idle. Split when possible.
    if b_min // tb < 2 and b_min >= 256:
        tb = _round_up(_cdiv(b_min, 2), 128)
    b_pad = _round_up(batch, tb)
    return tb, b_pad


def _mlp_kernel(xt_ref, w1_ref, b1_ref, w2_ref, b2_ref, w3_ref, b3_ref, o_ref,
                *, num_hidden_layers):
    """One batch tile, batch-on-lanes layout: activations are h^T (H_pad, tb)."""
    tb = xt_ref.shape[1]

    x_t = xt_ref[...]                                        # (F_pad, tb) f32

    # Layer 1: h^T = tanh(W1 @ x^T + b1). Zero-padded rows of W1/b1 keep the
    # padded hidden rows at exactly 0 (tanh(0) == 0), so padding is inert.
    h = jnp.tanh(
        jnp.dot(w1_ref[...], x_t, preferred_element_type=jnp.float32)
        + b1_ref[...])                                       # (H_pad, tb)

    # Hidden layers: every layer reuses W_2 / b_2, exactly like the module.
    # Hoist the ref reads and the bias lane-broadcast out of the loop.
    w2 = w2_ref[...]                                         # (H_pad, H_pad)
    b2 = jnp.broadcast_to(b2_ref[...], (w2.shape[0], tb))    # (H_pad, tb)

    def hidden_layer(hh):
        return jnp.tanh(jnp.dot(w2, hh, preferred_element_type=jnp.float32) + b2)

    if num_hidden_layers <= 8:
        for _ in range(num_hidden_layers):
            h = hidden_layer(h)
    else:
        # Deep nets: bound vreg live ranges with a real loop instead of a huge
        # unrolled trace.
        h = jax.lax.fori_loop(0, num_hidden_layers,
                              lambda _i, hh: hidden_layer(hh), h)

    # Output layer: out^T = W3 @ h^T + b3 (no activation). (O_pad, tb) is a
    # lane-dense tile -> unmasked stores, ~16x less HBM writeback than the
    # previous (tb, 128) padded output.
    out = jnp.dot(w3_ref[...], h, preferred_element_type=jnp.float32) + b3_ref[...]
    o_ref[...] = out.astype(o_ref.dtype)


def pack_params(params):
    """Pad + orient the weights ONCE (outside the per-call hot path).

    Returns (packed_arrays, meta) where packed_arrays = (W1, b1, W2, b2, W3, b3)
    with shapes (H_pad,F_pad), (H_pad,1), (H_pad,H_pad), (H_pad,1),
    (O_pad,H_pad), (O_pad,1); all zero-padded f32.
    """
    H, F = params["W_1"].shape
    O = params["W_3"].shape[0]
    H_pad, F_pad, O_pad = _round_up(H, 8), _round_up(F, 8), _round_up(O, 8)
    f32 = jnp.float32
    w1 = jnp.zeros((H_pad, F_pad), f32).at[:H, :F].set(params["W_1"].astype(f32))
    b1 = jnp.zeros((H_pad, 1), f32).at[:H, 0].set(params["b_1"].astype(f32))
    w2 = jnp.zeros((H_pad, H_pad), f32).at[:H, :H].set(params["W_2"].astype(f32))
    b2 = jnp.zeros((H_pad, 1), f32).at[:H, 0].set(params["b_2"].astype(f32))
    w3 = jnp.zeros((O_pad, H_pad), f32).at[:O, :H].set(params["W_3"].astype(f32))
    b3 = jnp.zeros((O_pad, 1), f32).at[:O, 0].set(params["b_3"].astype(f32))
    meta = {"num_features": F, "num_hidden": H, "num_output": O}
    return (w1, b1, w2, b2, w3, b3), meta


@functools.partial(jax.jit,
                   static_argnames=("num_output", "num_hidden_layers", "block_b"))
def _forward_impl(x, w1, b1, w2, b2, w3, b3, *,
                  num_output, num_hidden_layers, block_b):
    B, F = x.shape
    F_pad = w1.shape[1]
    H_pad = w1.shape[0]
    O_pad = w3.shape[0]

    tb, b_pad = _choose_batch_tile(B, block_b)

    # Prologue (fused under this jit): x^T, zero-padded to (F_pad, b_pad).
    x_t = x.astype(jnp.float32).T
    if F_pad != F or b_pad != B:
        x_t = jnp.pad(x_t, ((0, F_pad - F), (0, b_pad - B)))

    kernel = functools.partial(_mlp_kernel, num_hidden_layers=num_hidden_layers)

    out_t = pl.pallas_call(
        kernel,
        out_shape=jax.ShapeDtypeStruct((O_pad, b_pad), jnp.float32),
        grid_spec=pltpu.PrefetchScalarGridSpec(
            num_scalar_prefetch=0,
            grid=(b_pad // tb,),
            in_specs=[
                pl.BlockSpec((F_pad, tb), lambda i: (0, i)),      # streamed x^T
                pl.BlockSpec((H_pad, F_pad), lambda i: (0, 0)),   # resident W1
                pl.BlockSpec((H_pad, 1), lambda i: (0, 0)),       # resident b1
                pl.BlockSpec((H_pad, H_pad), lambda i: (0, 0)),   # resident W2
                pl.BlockSpec((H_pad, 1), lambda i: (0, 0)),       # resident b2
                pl.BlockSpec((O_pad, H_pad), lambda i: (0, 0)),   # resident W3
                pl.BlockSpec((O_pad, 1), lambda i: (0, 0)),       # resident b3
            ],
            out_specs=pl.BlockSpec((O_pad, tb), lambda i: (0, i)),  # lane-dense
        ),
        compiler_params=pltpu.CompilerParams(
            dimension_semantics=("parallel",),     # megacore sharding on v7x
        ),
    )(x_t, w1, b1, w2, b2, w3, b3)

    # Epilogue (fused under this jit): slice real rows/cols, return batch-major.
    return out_t[:num_output, :B].T.astype(x.dtype)


def net_forward(x, packed, meta, num_hidden_layers, *, block_b=1024):
    w1, b1, w2, b2, w3, b3 = packed
    return _forward_impl(x, w1, b1, w2, b2, w3, b3,
                         num_output=meta["num_output"],
                         num_hidden_layers=num_hidden_layers,
                         block_b=block_b)


def xavier_normal(key, shape):
    # torch.nn.init.xavier_normal_ on a (fan_out, fan_in) weight.
    fan_out, fan_in = shape
    std = (2.0 / (fan_in + fan_out)) ** 0.5
    return std * jax.random.normal(key, shape, dtype=jnp.float32)


def init_params(key, num_hidden, num_features, num_output):
    k1, k2, k3 = jax.random.split(key, 3)
    return {
        "W_1": xavier_normal(k1, (num_hidden, num_features)),
        "b_1": jnp.zeros((num_hidden,), jnp.float32),
        "W_2": xavier_normal(k2, (num_hidden, num_hidden)),
        "b_2": jnp.zeros((num_hidden,), jnp.float32),
        "W_3": xavier_normal(k3, (num_output, num_hidden)),
        "b_3": jnp.zeros((num_output,), jnp.float32),
    }


def net_forward_ref(x, params, num_hidden_layers):
    h = jnp.tanh(x @ params["W_1"].T + params["b_1"])
    for _ in range(num_hidden_layers):
        h = jnp.tanh(h @ params["W_2"].T + params["b_2"])
    return h @ params["W_3"].T + params["b_3"]


if __name__ == "__main__":
    # SIRD-style sizes: 4 input features (S, I, R, D), 4 outputs.
    num_hidden, num_features, num_output, num_hidden_layers = 32, 4, 4, 2

    key = jax.random.PRNGKey(0)
    k_params, k_x1, k_x2 = jax.random.split(key, 3)
    params = init_params(k_params, num_hidden, num_features, num_output)
    packed, meta = pack_params(params)          # packing hoisted out of hot path

    # Small-batch check (single grid step).
    x_small = jax.random.normal(k_x1, (8, num_features), dtype=jnp.float32)
    out_small = jax.block_until_ready(
        net_forward(x_small, packed, meta, num_hidden_layers))
    ref_small = net_forward_ref(x_small, params, num_hidden_layers)
    assert out_small.shape == (8, num_output)
    assert jnp.allclose(out_small, ref_small, atol=1e-4, rtol=1e-4)

    # Larger batch: batch padding + a multi-step "parallel" grid (>= 2 tiles).
    x_big = jax.random.normal(k_x2, (200, num_features), dtype=jnp.float32)
    out_big = jax.block_until_ready(
        net_forward(x_big, packed, meta, num_hidden_layers))
    ref_big = net_forward_ref(x_big, params, num_hidden_layers)
    assert out_big.shape == (200, num_output)
    assert jnp.allclose(out_big, ref_big, atol=1e-4, rtol=1e-4)

    print("KERNEL_OK")
</pallas_src>

<mosaic_0001>
module attributes {stable_mosaic.version = 11 : i64} {
  func.func @_mlp_kernel(%arg0: i32, %arg1: memref<8x128xf32, #tpu.memory_space<vmem>>, %arg2: memref<32x8xf32, #tpu.memory_space<vmem>>, %arg3: memref<32x1xf32, #tpu.memory_space<vmem>>, %arg4: memref<32x32xf32, #tpu.memory_space<vmem>>, %arg5: memref<32x1xf32, #tpu.memory_space<vmem>>, %arg6: memref<8x32xf32, #tpu.memory_space<vmem>>, %arg7: memref<8x1xf32, #tpu.memory_space<vmem>>, %arg8: memref<8x128xf32, #tpu.memory_space<vmem>>) attributes {dimension_semantics = [#tpu.dimension_semantics<parallel>], iteration_bounds = array<i64: 1>, scalar_prefetch = 0 : i64, scratch_operands = 0 : i64, tpu.core_type = #tpu.core_type<tc>, window_params = [{transform_indices = @transform_0, window_bounds = array<i64: 8, 128>}, {pipeline_mode = #tpu.pipeline_mode<synchronous>, transform_indices = @transform_1, window_bounds = array<i64: 32, 8>}, {pipeline_mode = #tpu.pipeline_mode<synchronous>, transform_indices = @transform_2, window_bounds = array<i64: 32, 1>}, {pipeline_mode = #tpu.pipeline_mode<synchronous>, transform_indices = @transform_3, window_bounds = array<i64: 32, 32>}, {pipeline_mode = #tpu.pipeline_mode<synchronous>, transform_indices = @transform_4, window_bounds = array<i64: 32, 1>}, {pipeline_mode = #tpu.pipeline_mode<synchronous>, transform_indices = @transform_5, window_bounds = array<i64: 8, 32>}, {pipeline_mode = #tpu.pipeline_mode<synchronous>, transform_indices = @transform_6, window_bounds = array<i64: 8, 1>}, {transform_indices = @transform_7, window_bounds = array<i64: 8, 128>}]} {
    %c0 = arith.constant 0 : index
    %c0_0 = arith.constant 0 : index
    %0 = vector.load %arg1[%c0, %c0_0] : memref<8x128xf32, #tpu.memory_space<vmem>>, vector<8x128xf32>
    %c0_1 = arith.constant 0 : index
    %c0_2 = arith.constant 0 : index
    %1 = vector.load %arg2[%c0_1, %c0_2] : memref<32x8xf32, #tpu.memory_space<vmem>>, vector<32x8xf32>
    %cst = arith.constant dense<0.000000e+00> : vector<32x128xf32>
    %2 = tpu.matmul %1, %0, %cst {dimension_numbers = #tpu.dot_dimension_numbers<[1], [0], [0], [1], [0, 0, 1, 1], [], []>} : vector<32x8xf32>, vector<8x128xf32>, vector<32x128xf32> -> vector<32x128xf32>
    %c0_3 = arith.constant 0 : index
    %c0_4 = arith.constant 0 : index
    %3 = vector.load %arg3[%c0_3, %c0_4] : memref<32x1xf32, #tpu.memory_space<vmem>>, vector<32x1xf32>
    %4 = vector.broadcast %3 : vector<32x1xf32> to vector<32x128xf32>
    %5 = arith.addf %2, %4 : vector<32x128xf32>
    %6 = math.tanh %5 : vector<32x128xf32>
    %c0_5 = arith.constant 0 : index
    %c0_6 = arith.constant 0 : index
    %7 = vector.load %arg4[%c0_5, %c0_6] : memref<32x32xf32, #tpu.memory_space<vmem>>, vector<32x32xf32>
    %c0_7 = arith.constant 0 : index
    %c0_8 = arith.constant 0 : index
    %8 = vector.load %arg5[%c0_7, %c0_8] : memref<32x1xf32, #tpu.memory_space<vmem>>, vector<32x1xf32>
    %9 = vector.shape_cast %8 : vector<32x1xf32> to vector<32x1xf32>
    %10 = vector.broadcast %9 : vector<32x1xf32> to vector<32x128xf32>
    %cst_9 = arith.constant dense<0.000000e+00> : vector<32x128xf32>
    %11 = tpu.matmul %7, %6, %cst_9 {dimension_numbers = #tpu.dot_dimension_numbers<[1], [0], [0], [1], [0, 0, 1, 1], [], []>} : vector<32x32xf32>, vector<32x128xf32>, vector<32x128xf32> -> vector<32x128xf32>
    %12 = arith.addf %11, %10 : vector<32x128xf32>
    %13 = math.tanh %12 : vector<32x128xf32>
    %cst_10 = arith.constant dense<0.000000e+00> : vector<32x128xf32>
    %14 = tpu.matmul %7, %13, %cst_10 {dimension_numbers = #tpu.dot_dimension_numbers<[1], [0], [0], [1], [0, 0, 1, 1], [], []>} : vector<32x32xf32>, vector<32x128xf32>, vector<32x128xf32> -> vector<32x128xf32>
    %15 = arith.addf %14, %10 : vector<32x128xf32>
    %16 = math.tanh %15 : vector<32x128xf32>
    %c0_11 = arith.constant 0 : index
    %c0_12 = arith.constant 0 : index
    %17 = vector.load %arg6[%c0_11, %c0_12] : memref<8x32xf32, #tpu.memory_space<vmem>>, vector<8x32xf32>
    %cst_13 = arith.constant dense<0.000000e+00> : vector<8x128xf32>
    %18 = tpu.matmul %17, %16, %cst_13 {dimension_numbers = #tpu.dot_dimension_numbers<[1], [0], [0], [1], [0, 0, 1, 1], [], []>} : vector<8x32xf32>, vector<32x128xf32>, vector<8x128xf32> -> vector<8x128xf32>
    %c0_14 = arith.constant 0 : index
    %c0_15 = arith.constant 0 : index
    %19 = vector.load %arg7[%c0_14, %c0_15] : memref<8x1xf32, #tpu.memory_space<vmem>>, vector<8x1xf32>
    %20 = vector.broadcast %19 : vector<8x1xf32> to vector<8x128xf32>
    %21 = arith.addf %18, %20 : vector<8x128xf32>
    %c0_16 = arith.constant 0 : index
    %c0_17 = arith.constant 0 : index
    %22 = vector.load %arg8[%c0_16, %c0_17] : memref<8x128xf32, #tpu.memory_space<vmem>>, vector<8x128xf32>
    tpu.vector_store %arg8[%c0_16, %c0_17], %21 {strides = array<i32>} : memref<8x128xf32, #tpu.memory_space<vmem>>, vector<8x128xf32>,
    return
  }
  func.func @transform_0(%arg0: i32) -> (i32, i32) {
    %c0_i32 = arith.constant 0 : i32
    %c0_i32_0 = arith.constant 0 : i32
    return %c0_i32, %arg0 : i32, i32
  }
  func.func @transform_1(%arg0: i32) -> (i32, i32) {
    %c0_i32 = arith.constant 0 : i32
    %c0_i32_0 = arith.constant 0 : i32
    %c0_i32_1 = arith.constant 0 : i32
    return %c0_i32, %c0_i32_0 : i32, i32
  }
  func.func @transform_2(%arg0: i32) -> (i32, i32) {
    %c0_i32 = arith.constant 0 : i32
    %c0_i32_0 = arith.constant 0 : i32
    %c0_i32_1 = arith.constant 0 : i32
    return %c0_i32, %c0_i32_0 : i32, i32
  }
  func.func @transform_3(%arg0: i32) -> (i32, i32) {
    %c0_i32 = arith.constant 0 : i32
    %c0_i32_0 = arith.constant 0 : i32
    %c0_i32_1 = arith.constant 0 : i32
    return %c0_i32, %c0_i32_0 : i32, i32
  }
  func.func @transform_4(%arg0: i32) -> (i32, i32) {
    %c0_i32 = arith.constant 0 : i32
    %c0_i32_0 = arith.constant 0 : i32
    %c0_i32_1 = arith.constant 0 : i32
    return %c0_i32, %c0_i32_0 : i32, i32
  }
  func.func @transform_5(%arg0: i32) -> (i32, i32) {
    %c0_i32 = arith.constant 0 : i32
    %c0_i32_0 = arith.constant 0 : i32
    %c0_i32_1 = arith.constant 0 : i32
    return %c0_i32, %c0_i32_0 : i32, i32
  }
  func.func @transform_6(%arg0: i32) -> (i32, i32) {
    %c0_i32 = arith.constant 0 : i32
    %c0_i32_0 = arith.constant 0 : i32
    %c0_i32_1 = arith.constant 0 : i32
    return %c0_i32, %c0_i32_0 : i32, i32
  }
  func.func @transform_7(%arg0: i32) -> (i32, i32) {
    %c0_i32 = arith.constant 0 : i32
    %c0_i32_0 = arith.constant 0 : i32
    return %c0_i32, %arg0 : i32, i32
  }
}

</mosaic_0001>

<llo_original>
// kernel: _forward_impl.1
$region0: #{_forward_impl.1}
  #allocation0 [shape = 'u32[]', space=smem, size = 0x4, offset = 0x4, fixed_abs, tag = 'smem constant byte address 0x4 - core index']
  #allocation1 [shape = 'u32[144,128]{1,0:T(1,128)}', space=vmem, size = 0x12000, scoped, tag = 'internal scratch']
  %s0 = inlined_call_operand.vmem [shape: f32[8,128], index: 0, kind: input, shape index: {}]
  %s1 = inlined_call_operand.vmem [shape: f32[32,8], index: 1, kind: input, shape index: {}]
  %s2 = inlined_call_operand.vmem [shape: f32[32,1], index: 2, kind: input, shape index: {}]
  %s3 = inlined_call_operand.vmem [shape: f32[32,32], index: 3, kind: input, shape index: {}]
  %s4 = inlined_call_operand.vmem [shape: f32[32,1], index: 4, kind: input, shape index: {}]
  %s5 = inlined_call_operand.vmem [shape: f32[8,32], index: 5, kind: input, shape index: {}]
  %s6 = inlined_call_operand.vmem [shape: f32[8,1], index: 6, kind: input, shape index: {}]
  %s7 = inlined_call_operand.vmem [shape: f32[8,128], index: 7, kind: output, shape index: {}]
  %s8 = sld [smem:[#allocation0]]
  $region38: #{_forward_impl.1} parent=0
    _
  %s10 = ssub.s32 1, %s8
  %s11 = scalar_select 0, %s10, %s8
  // Predicated region
  $region2: #{_forward_impl.1} parent=0 // pred_check
    _
  $region3: #{_forward_impl.1} parent=0 // pred_check_branch
    %13 = sbr.rel (0) target = $region5
  $region4: #{_forward_impl.1} parent=0 // pred_region
    _
  $region5: #{_forward_impl.1} parent=0 // pred_fallthru
    _
  // Predicated region
  $region6: #{_forward_impl.1} parent=0 // pred_check
    _
  $region7: #{_forward_impl.1} parent=0 // pred_check_branch
    %15 = sbr.rel (0) target = $region9
  $region8: #{_forward_impl.1} parent=0 // pred_region
    _
  $region9: #{_forward_impl.1} parent=0 // pred_fallthru
    _
  // Predicated region
  $region10: #{_forward_impl.1} parent=0 // pred_check
    _
  $region11: #{_forward_impl.1} parent=0 // pred_check_branch
    %17 = sbr.rel (0) target = $region13
  $region12: #{_forward_impl.1} parent=0 // pred_region
    _
  $region13: #{_forward_impl.1} parent=0 // pred_fallthru
    _
  // Predicated region
  $region14: #{_forward_impl.1} parent=0 // pred_check
    _
  $region15: #{_forward_impl.1} parent=0 // pred_check_branch
    %19 = sbr.rel (0) target = $region17
  $region16: #{_forward_impl.1} parent=0 // pred_region
    _
  $region17: #{_forward_impl.1} parent=0 // pred_fallthru
    _
  // Predicated region
  $region18: #{_forward_impl.1} parent=0 // pred_check
    _
  $region19: #{_forward_impl.1} parent=0 // pred_check_branch
    %21 = sbr.rel (0) target = $region21
  $region20: #{_forward_impl.1} parent=0 // pred_region
    _
  $region21: #{_forward_impl.1} parent=0 // pred_fallthru
    _
  // Predicated region
  $region22: #{_forward_impl.1} parent=0 // pred_check
    _
  $region23: #{_forward_impl.1} parent=0 // pred_check_branch
    %23 = sbr.rel (0) target = $region25
  $region24: #{_forward_impl.1} parent=0 // pred_region
    _
  $region25: #{_forward_impl.1} parent=0 // pred_fallthru
    _
  // Predicated region
  $region26: #{_forward_impl.1} parent=0 // pred_check
    _
  $region27: #{_forward_impl.1} parent=0 // pred_check_branch
    %25 = sbr.rel (0) target = $region29
  $region28: #{_forward_impl.1} parent=0 // pred_region
    _
  $region29: #{_forward_impl.1} parent=0 // pred_fallthru
    _
  %v26 = vld [vmem:[%s0] sm:$0xff]
  %v27 = vld [vmem:[%s1] sm:$0xff]
  %v28 = vld [vmem:[%s1 + $0x8] sm:$0xff]
  %v29 = vld [vmem:[%s1 + $0x10] sm:$0xff]
  %v30 = vld [vmem:[%s1 + $0x18] sm:$0xff]
  %v31 = vld [vmem:[%s2] sm:$0xff]
  %v32 = vld [vmem:[%s2 + $0x8] sm:$0xff]
  %v33 = vld [vmem:[%s2 + $0x10] sm:$0xff]
  %v34 = vld [vmem:[%s2 + $0x18] sm:$0xff]
  %36 = vset.pattern.permute.xlu0 0
  %37 = vperm.xlu0 %36, %v31
  %v38 = vpop.permute.xlu0 %37
  %41 = vset.pattern.permute.xlu0 0
  %42 = vperm.xlu0 %41, %v32
  %v43 = vpop.permute.xlu0 %42
  %46 = vset.pattern.permute.xlu0 0
  %47 = vperm.xlu0 %46, %v33
  %v48 = vpop.permute.xlu0 %47
  %51 = vset.pattern.permute.xlu0 0
  %52 = vperm.xlu0 %51, %v34
  %v53 = vpop.permute.xlu0 %52
  %vm55 = vcmask 64512
  %v57 = vsel %vm55, %v27, 0
  %v60 = vsel %vm55, %v28, 0
  %v63 = vsel %vm55, %v29, 0
  %v66 = vsel %vm55, %v30, 0
  %68 = vmatprep.subr.mxu0 0.0
  %69 = vmatpush1.msra.mxu0 %v26
  %70 = vmatprep.subr.mxu0 0.0
  %71 = vmatpush1.msra.mxu0 0.0
  %72 = vmatprep.subr.mxu0 0.0
  %73 = vmatpush1.msra.mxu0 0.0
  %74 = vmatprep.subr.mxu0 0.0
  %75 = vmatpush1.msra.mxu0 0.0
  %76 = vmatprep.subr.mxu0 0.0
  %77 = vmatpush1.msra.mxu0 0.0
  %78 = vmatprep.subr.mxu0 0.0
  %79 = vmatpush1.msra.mxu0 0.0
  %80 = vmatprep.subr.mxu0 0.0
  %81 = vmatpush1.msra.mxu0 0.0
  %82 = vmatprep.subr.mxu0 0.0
  %83 = vmatpush1.msra.mxu0 0.0
  %84 = vmatprep.subr.mxu0 0.0
  %85 = vmatpush1.msra.mxu0 0.0
  %86 = vmatprep.subr.mxu0 0.0
  %87 = vmatpush1.msra.mxu0 0.0
  %88 = vmatprep.subr.mxu0 0.0
  %89 = vmatpush1.msra.mxu0 0.0
  %90 = vmatprep.subr.mxu0 0.0
  %91 = vmatpush1.msra.mxu0 0.0
  %92 = vmatprep.subr.mxu0 0.0
  %93 = vmatpush1.msra.mxu0 0.0
  %94 = vmatprep.subr.mxu0 0.0
  %95 = vmatpush1.msra.mxu0 0.0
  %96 = vmatprep.subr.mxu0 0.0
  %97 = vmatpush1.msra.mxu0 0.0
  %98 = vmatprep.subr.mxu0 0.0
  %99 = vmatpush1.msra.mxu0 0.0
  %100 = vmatprep.subr.mxu0 0.0
  %101 = vmatpush1.msra.mxu0 0.0
  %102 = vmatprep.subr.mxu0 0.0
  %103 = vmatpush1.msra.mxu0 0.0
  %104 = vmatprep.subr.mxu0 0.0
  %105 = vmatpush1.msra.mxu0 0.0
  %106 = vmatprep.subr.mxu0 0.0
  %107 = vmatpush1.msra.mxu0 0.0
  %108 = vmatprep.subr.mxu0 0.0
  %109 = vmatpush1.msra.mxu0 0.0
  %110 = vmatprep.subr.mxu0 0.0
  %111 = vmatpush1.msra.mxu0 0.0
  %112 = vmatprep.subr.mxu0 0.0
  %113 = vmatpush1.msra.mxu0 0.0
  %114 = vmatprep.subr.mxu0 0.0
  %115 = vmatpush1.msra.mxu0 0.0
  %116 = vmatprep.subr.mxu0 0.0
  %117 = vmatpush1.msra.mxu0 0.0
  %118 = vmatprep.subr.mxu0 0.0
  %119 = vmatpush1.msra.mxu0 0.0
  %120 = vmatprep.subr.mxu0 0.0
  %121 = vmatpush1.msra.mxu0 0.0
  %122 = vmatprep.subr.mxu0 0.0
  %123 = vmatpush1.msra.mxu0 0.0
  %124 = vmatprep.subr.mxu0 0.0
  %125 = vmatpush1.msra.mxu0 0.0
  %126 = vmatprep.subr.mxu0 0.0
  %127 = vmatpush1.msra.mxu0 0.0
  %128 = vmatprep.subr.mxu0 0.0
  %129 = vmatpush1.msra.mxu0 0.0
  %130 = vmatprep.subr.mxu0 0.0
  %131 = vmatpush1.msra.mxu0 0.0
  %132 = vmatprep.mubr.f32.mxu0 0.0
  %133 = vmatmul.mubr.f32.gmra.mrb[0].mxu0 %v57
  %v134 = vpop.f32.mrb[0].mxu0
  %v135 = vadd.f32 %v38, %v134
  %v136 = vpop.f32.mrb[0].mxu0
  %137 = vmatprep.mubr.f32.mxu0 0.0
  %138 = vmatmul.mubr.f32.gmra.mrb[0].mxu0 %v60
  %v139 = vpop.f32.mrb[0].mxu0
  %v140 = vadd.f32 %v43, %v139
  %v141 = vpop.f32.mrb[0].mxu0
  %142 = vmatprep.mubr.f32.mxu0 0.0
  %143 = vmatmul.mubr.f32.gmra.mrb[0].mxu0 %v63
  %v144 = vpop.f32.mrb[0].mxu0
  %v145 = vadd.f32 %v48, %v144
  %v146 = vpop.f32.mrb[0].mxu0
  %147 = vmatprep.mubr.f32.mxu0 0.0
  %148 = vmatmul.mubr.f32.gmra.mrb[0].mxu0 %v66
  %v149 = vpop.f32.mrb[0].mxu0
  %v150 = vadd.f32 %v53, %v149
  %v151 = vpop.f32.mrb[0].mxu0
  %152 = vdwg.mxu0
  %v153 = vtanh.pop %v135
  %v154 = vtanh.pop %v140
  %v155 = vtanh.pop %v145
  %v156 = vtanh.pop %v150
  %v157 = vld [vmem:[%s3] sm:$0xff]
  %v158 = vld [vmem:[%s3 + $0x8] sm:$0xff]
  %v159 = vld [vmem:[%s3 + $0x10] sm:$0xff]
  %v160 = vld [vmem:[%s3 + $0x18] sm:$0xff]
  %v161 = vld [vmem:[%s4] sm:$0xff]
  %v162 = vld [vmem:[%s4 + $0x8] sm:$0xff]
  %v163 = vld [vmem:[%s4 + $0x10] sm:$0xff]
  %v164 = vld [vmem:[%s4 + $0x18] sm:$0xff]
  %166 = vset.pattern.permute.xlu0 0
  %167 = vperm.xlu0 %166, %v161
  %v168 = vpop.permute.xlu0 %167
  %171 = vset.pattern.permute.xlu0 0
  %172 = vperm.xlu0 %171, %v162
  %v173 = vpop.permute.xlu0 %172
  %176 = vset.pattern.permute.xlu0 0
  %177 = vperm.xlu0 %176, %v163
  %v178 = vpop.permute.xlu0 %177
  %181 = vset.pattern.permute.xlu0 0
  %182 = vperm.xlu0 %181, %v164
  %v183 = vpop.permute.xlu0 %182
  %vm185 = vcmask 261120
  %v187 = vsel %vm185, %v157, 0
  %v190 = vsel %vm185, %v158, 0
  %v193 = vsel %vm185, %v159, 0
  %v196 = vsel %vm185, %v160, 0
  %198 = vmatprep.subr.mxu0 0.0
  %199 = vmatpush1.msra.mxu0 %v153
  %200 = vmatprep.subr.mxu0 0.0
  %201 = vmatpush1.msra.mxu0 %v154
  %202 = vmatprep.subr.mxu0 0.0
  %203 = vmatpush1.msra.mxu0 %v155
  %204 = vmatprep.subr.mxu0 0.0
  %205 = vmatpush1.msra.mxu0 %v156
  %206 = vmatprep.subr.mxu0 0.0
  %207 = vmatpush1.msra.mxu0 0.0
  %208 = vmatprep.subr.mxu0 0.0
  %209 = vmatpush1.msra.mxu0 0.0
  %210 = vmatprep.subr.mxu0 0.0
  %211 = vmatpush1.msra.mxu0 0.0
  %212 = vmatprep.subr.mxu0 0.0
  %213 = vmatpush1.msra.mxu0 0.0
  %214 = vmatprep.subr.mxu0 0.0
  %215 = vmatpush1.msra.mxu0 0.0
  %216 = vmatprep.subr.mxu0 0.0
  %217 = vmatpush1.msra.mxu0 0.0
  %218 = vmatprep.subr.mxu0 0.0
  %219 = vmatpush1.msra.mxu0 0.0
  %220 = vmatprep.subr.mxu0 0.0
  %221 = vmatpush1.msra.mxu0 0.0
  %222 = vmatprep.subr.mxu0 0.0
  %223 = vmatpush1.msra.mxu0 0.0
  %224 = vmatprep.subr.mxu0 0.0
  %225 = vmatpush1.msra.mxu0 0.0
  %226 = vmatprep.subr.mxu0 0.0
  %227 = vmatpush1.msra.mxu0 0.0
  %228 = vmatprep.subr.mxu0 0.0
  %229 = vmatpush1.msra.mxu0 0.0
  %230 = vmatprep.subr.mxu0 0.0
  %231 = vmatpush1.msra.mxu0 0.0
  %232 = vmatprep.subr.mxu0 0.0
  %233 = vmatpush1.msra.mxu0 0.0
  %234 = vmatprep.subr.mxu0 0.0
  %235 = vmatpush1.msra.mxu0 0.0
  %236 = vmatprep.subr.mxu0 0.0
  %237 = vmatpush1.msra.mxu0 0.0
  %238 = vmatprep.subr.mxu0 0.0
  %239 = vmatpush1.msra.mxu0 0.0
  %240 = vmatprep.subr.mxu0 0.0
  %241 = vmatpush1.msra.mxu0 0.0
  %242 = vmatprep.subr.mxu0 0.0
  %243 = vmatpush1.msra.mxu0 0.0
  %244 = vmatprep.subr.mxu0 0.0
  %245 = vmatpush1.msra.mxu0 0.0
  %246 = vmatprep.subr.mxu0 0.0
  %247 = vmatpush1.msra.mxu0 0.0
  %248 = vmatprep.subr.mxu0 0.0
  %249 = vmatpush1.msra.mxu0 0.0
  %250 = vmatprep.subr.mxu0 0.0
  %251 = vmatpush1.msra.mxu0 0.0
  %252 = vmatprep.subr.mxu0 0.0
  %253 = vmatpush1.msra.mxu0 0.0
  %254 = vmatprep.subr.mxu0 0.0
  %255 = vmatpush1.msra.mxu0 0.0
  %256 = vmatprep.subr.mxu0 0.0
  %257 = vmatpush1.msra.mxu0 0.0
  %258 = vmatprep.subr.mxu0 0.0
  %259 = vmatpush1.msra.mxu0 0.0
  %260 = vmatprep.subr.mxu0 0.0
  %261 = vmatpush1.msra.mxu0 0.0
  %262 = vmatprep.mubr.f32.mxu0 0.0
  %263 = vmatmul.mubr.f32.gmra.mrb[0].mxu0 %v187
  %v264 = vpop.f32.mrb[0].mxu0
  %v265 = vadd.f32 %v168, %v264
  %v266 = vpop.f32.mrb[0].mxu0
  %267 = vmatprep.mubr.f32.mxu0 0.0
  %268 = vmatmul.mubr.f32.gmra.mrb[0].mxu0 %v190
  %v269 = vpop.f32.mrb[0].mxu0
  %v270 = vadd.f32 %v173, %v269
  %v271 = vpop.f32.mrb[0].mxu0
  %272 = vmatprep.mubr.f32.mxu0 0.0
  %273 = vmatmul.mubr.f32.gmra.mrb[0].mxu0 %v193
  %v274 = vpop.f32.mrb[0].mxu0
  %v275 = vadd.f32 %v178, %v274
  %v276 = vpop.f32.mrb[0].mxu0
  %277 = vmatprep.mubr.f32.mxu0 0.0
  %278 = vmatmul.mubr.f32.gmra.mrb[0].mxu0 %v196
  %v279 = vpop.f32.mrb[0].mxu0
  %v280 = vadd.f32 %v183, %v279
  %v281 = vpop.f32.mrb[0].mxu0
  %282 = vdwg.mxu0
  %v283 = vtanh.pop %v265
  %v284 = vtanh.pop %v270
  %v285 = vtanh.pop %v275
  %v286 = vtanh.pop %v280
  %287 = vmatprep.subr.mxu0 0.0
  %288 = vmatpush1.msra.mxu0 %v283
  %289 = vmatprep.subr.mxu0 0.0
  %290 = vmatpush1.msra.mxu0 %v284
  %291 = vmatprep.subr.mxu0 0.0
  %292 = vmatpush1.msra.mxu0 %v285
  %293 = vmatprep.subr.mxu0 0.0
  %294 = vmatpush1.msra.mxu0 %v286
  %295 = vmatprep.subr.mxu0 0.0
  %296 = vmatpush1.msra.mxu0 0.0
  %297 = vmatprep.subr.mxu0 0.0
  %298 = vmatpush1.msra.mxu0 0.0
  %299 = vmatprep.subr.mxu0 0.0
  %300 = vmatpush1.msra.mxu0 0.0
  %301 = vmatprep.subr.mxu0 0.0
  %302 = vmatpush1.msra.mxu0 0.0
  %303 = vmatprep.subr.mxu0 0.0
  %304 = vmatpush1.msra.mxu0 0.0
  %305 = vmatprep.subr.mxu0 0.0
  %306 = vmatpush1.msra.mxu0 0.0
  %307 = vmatprep.subr.mxu0 0.0
  %308 = vmatpush1.msra.mxu0 0.0
  %309 = vmatprep.subr.mxu0 0.0
  %310 = vmatpush1.msra.mxu0 0.0
  %311 = vmatprep.subr.mxu0 0.0
  %312 = vmatpush1.msra.mxu0 0.0
  %313 = vmatprep.subr.mxu0 0.0
  %314 = vmatpush1.msra.mxu0 0.0
  %315 = vmatprep.subr.mxu0 0.0
  %316 = vmatpush1.msra.mxu0 0.0
  %317 = vmatprep.subr.mxu0 0.0
  %318 = vmatpush1.msra.mxu0 0.0
  %319 = vmatprep.subr.mxu0 0.0
  %320 = vmatpush1.msra.mxu0 0.0
  %321 = vmatprep.subr.mxu0 0.0
  %322 = vmatpush1.msra.mxu0 0.0
  %323 = vmatprep.subr.mxu0 0.0
  %324 = vmatpush1.msra.mxu0 0.0
  %325 = vmatprep.subr.mxu0 0.0
  %326 = vmatpush1.msra.mxu0 0.0
  %327 = vmatprep.subr.mxu0 0.0
  %328 = vmatpush1.msra.mxu0 0.0
  %329 = vmatprep.subr.mxu0 0.0
  %330 = vmatpush1.msra.mxu0 0.0
  %331 = vmatprep.subr.mxu0 0.0
  %332 = vmatpush1.msra.mxu0 0.0
  %333 = vmatprep.subr.mxu0 0.0
  %334 = vmatpush1.msra.mxu0 0.0
  %335 = vmatprep.subr.mxu0 0.0
  %336 = vmatpush1.msra.mxu0 0.0
  %337 = vmatprep.subr.mxu0 0.0
  %338 = vmatpush1.msra.mxu0 0.0
  %339 = vmatprep.subr.mxu0 0.0
  %340 = vmatpush1.msra.mxu0 0.0
  %341 = vmatprep.subr.mxu0 0.0
  %342 = vmatpush1.msra.mxu0 0.0
  %343 = vmatprep.subr.mxu0 0.0
  %344 = vmatpush1.msra.mxu0 0.0
  %345 = vmatprep.subr.mxu0 0.0
  %346 = vmatpush1.msra.mxu0 0.0
  %347 = vmatprep.subr.mxu0 0.0
  %348 = vmatpush1.msra.mxu0 0.0
  %349 = vmatprep.subr.mxu0 0.0
  %350 = vmatpush1.msra.mxu0 0.0
  %351 = vmatprep.mubr.f32.mxu0 0.0
  %352 = vmatmul.mubr.f32.gmra.mrb[0].mxu0 %v187
  %v353 = vpop.f32.mrb[0].mxu0
  %v354 = vadd.f32 %v168, %v353
  %v355 = vpop.f32.mrb[0].mxu0
  %356 = vmatprep.mubr.f32.mxu0 0.0
  %357 = vmatmul.mubr.f32.gmra.mrb[0].mxu0 %v190
  %v358 = vpop.f32.mrb[0].mxu0
  %v359 = vadd.f32 %v173, %v358
  %v360 = vpop.f32.mrb[0].mxu0
  %361 = vmatprep.mubr.f32.mxu0 0.0
  %362 = vmatmul.mubr.f32.gmra.mrb[0].mxu0 %v193
  %v363 = vpop.f32.mrb[0].mxu0
  %v364 = vadd.f32 %v178, %v363
  %v365 = vpop.f32.mrb[0].mxu0
  %366 = vmatprep.mubr.f32.mxu0 0.0
  %367 = vmatmul.mubr.f32.gmra.mrb[0].mxu0 %v196
  %v368 = vpop.f32.mrb[0].mxu0
  %v369 = vadd.f32 %v183, %v368
  %v370 = vpop.f32.mrb[0].mxu0
  %371 = vdwg.mxu0
  %v372 = vtanh.pop %v354
  %v373 = vtanh.pop %v359
  %v374 = vtanh.pop %v364
  %v375 = vtanh.pop %v369
  %v376 = vld [vmem:[%s5] sm:$0xff]
  %v377 = vld [vmem:[%s6] sm:$0xff]
  %379 = vset.pattern.permute.xlu0 0
  %380 = vperm.xlu0 %379, %v377
  %v381 = vpop.permute.xlu0 %380
  %v384 = vsel %vm185, %v376, 0
  %386 = vmatprep.subr.mxu0 0.0
  %387 = vmatpush1.msra.mxu0 %v372
  %388 = vmatprep.subr.mxu0 0.0
  %389 = vmatpush1.msra.mxu0 %v373
  %390 = vmatprep.subr.mxu0 0.0
  %391 = vmatpush1.msra.mxu0 %v374
  %392 = vmatprep.subr.mxu0 0.0
  %393 = vmatpush1.msra.mxu0 %v375
  %394 = vmatprep.subr.mxu0 0.0
  %395 = vmatpush1.msra.mxu0 0.0
  %396 = vmatprep.subr.mxu0 0.0
  %397 = vmatpush1.msra.mxu0 0.0
  %398 = vmatprep.subr.mxu0 0.0
  %399 = vmatpush1.msra.mxu0 0.0
  %400 = vmatprep.subr.mxu0 0.0
  %401 = vmatpush1.msra.mxu0 0.0
  %402 = vmatprep.subr.mxu0 0.0
  %403 = vmatpush1.msra.mxu0 0.0
  %404 = vmatprep.subr.mxu0 0.0
  %405 = vmatpush1.msra.mxu0 0.0
  %406 = vmatprep.subr.mxu0 0.0
  %407 = vmatpush1.msra.mxu0 0.0
  %408 = vmatprep.subr.mxu0 0.0
  %409 = vmatpush1.msra.mxu0 0.0
  %410 = vmatprep.subr.mxu0 0.0
  %411 = vmatpush1.msra.mxu0 0.0
  %412 = vmatprep.subr.mxu0 0.0
  %413 = vmatpush1.msra.mxu0 0.0
  %414 = vmatprep.subr.mxu0 0.0
  %415 = vmatpush1.msra.mxu0 0.0
  %416 = vmatprep.subr.mxu0 0.0
  %417 = vmatpush1.msra.mxu0 0.0
  %418 = vmatprep.subr.mxu0 0.0
  %419 = vmatpush1.msra.mxu0 0.0
  %420 = vmatprep.subr.mxu0 0.0
  %421 = vmatpush1.msra.mxu0 0.0
  %422 = vmatprep.subr.mxu0 0.0
  %423 = vmatpush1.msra.mxu0 0.0
  %424 = vmatprep.subr.mxu0 0.0
  %425 = vmatpush1.msra.mxu0 0.0
  %426 = vmatprep.subr.mxu0 0.0
  %427 = vmatpush1.msra.mxu0 0.0
  %428 = vmatprep.subr.mxu0 0.0
  %429 = vmatpush1.msra.mxu0 0.0
  %430 = vmatprep.subr.mxu0 0.0
  %431 = vmatpush1.msra.mxu0 0.0
  %432 = vmatprep.subr.mxu0 0.0
  %433 = vmatpush1.msra.mxu0 0.0
  %434 = vmatprep.subr.mxu0 0.0
  %435 = vmatpush1.msra.mxu0 0.0
  %436 = vmatprep.subr.mxu0 0.0
  %437 = vmatpush1.msra.mxu0 0.0
  %438 = vmatprep.subr.mxu0 0.0
  %439 = vmatpush1.msra.mxu0 0.0
  %440 = vmatprep.subr.mxu0 0.0
  %441 = vmatpush1.msra.mxu0 0.0
  %442 = vmatprep.subr.mxu0 0.0
  %443 = vmatpush1.msra.mxu0 0.0
  %444 = vmatprep.subr.mxu0 0.0
  %445 = vmatpush1.msra.mxu0 0.0
  %446 = vmatprep.subr.mxu0 0.0
  %447 = vmatpush1.msra.mxu0 0.0
  %448 = vmatprep.subr.mxu0 0.0
  %449 = vmatpush1.msra.mxu0 0.0
  %450 = vmatprep.mubr.f32.mxu0 0.0
  %451 = vmatmul.mubr.f32.gmra.mrb[0].mxu0 %v384
  %v452 = vpop.f32.mrb[0].mxu0
  %v453 = vadd.f32 %v381, %v452
  %v454 = vpop.f32.mrb[0].mxu0
  %455 = vdwg.mxu0
  %456 = vst [vmem:[%s7] sm:$0xff] %v453
  // Predicated region
  $region30: #{_forward_impl.1} parent=0 // pred_check
    _
  $region31: #{_forward_impl.1} parent=0 // pred_check_branch
    %458 = sbr.rel (0) target = $region33
  $region32: #{_forward_impl.1} parent=0 // pred_region
    _
  $region33: #{_forward_impl.1} parent=0 // pred_fallthru
    _
  // Predicated region
  $region34: #{_forward_impl.1} parent=0 // pred_check
    _
  $region35: #{_forward_impl.1} parent=0 // pred_check_branch
    %460 = sbr.rel (0) target = $region37
  $region36: #{_forward_impl.1} parent=0 // pred_region
    _
  $region37: #{_forward_impl.1} parent=0 // pred_fallthru
    _

</llo_original>
